<compile_context>
chip_gen: v6e
topology: v6e:2x2x1
jax: 0.10.0
libtpu: 0.0.40
codegen_flags: <defaults>
</compile_context>

<pallas_src>
import functools

import jax
import jax.numpy as jnp
from jax.experimental import pallas as pl
from jax.experimental.pallas import tpu as pltpu


def patcher_kernel(x_ref, o_ref, *, L, patch_length, stride, patch_num, group):
    """x_ref: (R, L) rows; o_ref: (R, patch_num * patch_length) lane-dense slab."""
    R = x_ref.shape[0]
    PL, S = patch_length, stride
    last_col = x_ref[:, L - 1:L]                   # (R, 1) right-edge replication value

    def make_patch(p):
        start = p * S                              # static python int
        if start + PL <= L:                        # fully inside the un-padded row
            return x_ref[:, start:start + PL]
        real = max(L - start, 0)                   # elements taken from the real row
        pad = jnp.broadcast_to(last_col, (R, PL - real))
        if real == 0:
            return pad
        return jnp.concatenate([x_ref[:, start:L], pad], axis=-1)

    # Assemble patches into >=128-lane groups; one full-width store per group
    # keeps the vst slot off the critical path (HBM-bound, not slot-bound).
    for g0 in range(0, patch_num, group):
        g1 = min(g0 + group, patch_num)
        pieces = [make_patch(p) for p in range(g0, g1)]
        blk = pieces[0] if len(pieces) == 1 else jnp.concatenate(pieces, axis=-1)
        o_ref[:, g0 * PL:g1 * PL] = blk


def _choose_block_rows(n_rows, row_bytes):
    """Pick the row-block size R (multiple of 8, sized for VMEM, >=2 programs)."""
    budget = 12 * 1024 * 1024                      # double-buffered in+out budget
    max_rows = max(8, budget // max(1, 2 * row_bytes))
    r = min(1024, int(max_rows))
    if n_rows > 8:
        # Aim for at least 2 grid programs so v7x's two TensorCores both work.
        r = min(r, -(-n_rows // 2))
    r = max(8, (r // 8) * 8)                       # multiple of 8 (f32 sublane rule)
    if n_rows <= r:
        r = n_rows                                 # single block == full dim (allowed)
    return r


def patcher(x, patch_length=16, stride=8):
    """JAX/Pallas equivalent of Patcher.forward."""
    B, C, L = x.shape
    assert L >= patch_length, "sequence length must be >= patch_length"
    assert stride >= 1
    patch_num = (L - patch_length) // stride + 1 + 1   # +1 from replication padding
    W = patch_num * patch_length

    N = B * C
    x_rows = x.reshape(N, L)                       # free row-major collapse
    itemsize = jnp.dtype(x.dtype).itemsize
    row_bytes = (L + W) * itemsize
    R = _choose_block_rows(N, row_bytes)
    grid = (pl.cdiv(N, R),)

    group = max(1, -(-128 // patch_length))        # patches per >=128-lane store group

    kernel = functools.partial(
        patcher_kernel,
        L=L,
        patch_length=patch_length,
        stride=stride,
        patch_num=patch_num,
        group=group,
    )

    out_rows = pl.pallas_call(
        kernel,
        out_shape=jax.ShapeDtypeStruct((N, W), x.dtype),
        grid=grid,
        in_specs=[pl.BlockSpec((R, L), lambda i: (i, 0))],
        out_specs=pl.BlockSpec((R, W), lambda i: (i, 0)),
        compiler_params=pltpu.CompilerParams(
            dimension_semantics=("parallel",),
            vmem_limit_bytes=32 * 1024 * 1024,
        ),
        cost_estimate=pl.CostEstimate(
            flops=0,
            transcendentals=0,
            bytes_accessed=int(N * (L + W) * itemsize),
        ),
    )(x_rows)

    out = out_rows.reshape(B, C, patch_num, patch_length)
    # torch's .squeeze(1): only removes the channel dim if it is 1.
    if C == 1:
        out = out[:, 0]
    return out


def _reference(x, patch_length=16, stride=8):
    """Pure-JAX reference (mirrors the PyTorch forward) for validation."""
    B, C, L = x.shape
    patch_num = (L - patch_length) // stride + 2
    xp = jnp.concatenate([x, jnp.repeat(x[:, :, -1:], stride, axis=-1)], axis=-1)
    patches = jnp.stack(
        [xp[:, :, p * stride:p * stride + patch_length] for p in range(patch_num)],
        axis=2,
    )  # (B, C, patch_num, patch_length)
    if C == 1:
        patches = patches[:, 0]
    return patches


if __name__ == "__main__":
    key = jax.random.PRNGKey(0)

    configs = [
        dict(B=2, C=1, L=32, patch_length=16, stride=8),   # typical C=1 (squeeze) case
        dict(B=2, C=4, L=64, patch_length=16, stride=8),   # multi-channel
        dict(B=4, C=4, L=64, patch_length=16, stride=8),   # multi-program grid
        dict(B=5, C=3, L=48, patch_length=16, stride=8),   # ragged row grid (N=15, R=8)
        dict(B=2, C=1, L=30, patch_length=8, stride=4),    # stride doesn't divide L - PL
    ]

    for i, cfg in enumerate(configs):
        key, sub = jax.random.split(key)
        x = jax.random.normal(sub, (cfg["B"], cfg["C"], cfg["L"]), dtype=jnp.float32)

        out = patcher(x, patch_length=cfg["patch_length"], stride=cfg["stride"])
        out = jax.block_until_ready(out)

        ref = _reference(x, patch_length=cfg["patch_length"], stride=cfg["stride"])
        assert out.shape == ref.shape, (cfg, out.shape, ref.shape)
        assert jnp.allclose(out, ref), f"Pallas output mismatch vs reference: {cfg}"

    print("KERNEL_OK")
</pallas_src>

<mosaic_0001>
module attributes {stable_mosaic.version = 11 : i64} {
  func.func @patcher_kernel(%arg0: i32, %arg1: memref<2x32xf32, #tpu.memory_space<vmem>>, %arg2: memref<2x64xf32, #tpu.memory_space<vmem>>) attributes {dimension_semantics = [#tpu.dimension_semantics<parallel>], iteration_bounds = array<i64: 1>, scalar_prefetch = 0 : i64, scratch_operands = 0 : i64, tpu.core_type = #tpu.core_type<tc>, window_params = [{transform_indices = @transform_0, window_bounds = array<i64: 2, 32>}, {transform_indices = @transform_1, window_bounds = array<i64: 2, 64>}]} {
    %c0 = arith.constant 0 : index
    %c31 = arith.constant 31 : index
    %0 = vector.load %arg1[%c0, %c31] : memref<2x32xf32, #tpu.memory_space<vmem>>, vector<2x1xf32>
    %c0_0 = arith.constant 0 : index
    %c0_1 = arith.constant 0 : index
    %1 = vector.load %arg1[%c0_0, %c0_1] : memref<2x32xf32, #tpu.memory_space<vmem>>, vector<2x16xf32>
    %c0_2 = arith.constant 0 : index
    %c8 = arith.constant 8 : index
    %2 = vector.load %arg1[%c0_2, %c8] : memref<2x32xf32, #tpu.memory_space<vmem>>, vector<2x16xf32>
    %c0_3 = arith.constant 0 : index
    %c16 = arith.constant 16 : index
    %3 = vector.load %arg1[%c0_3, %c16] : memref<2x32xf32, #tpu.memory_space<vmem>>, vector<2x16xf32>
    %4 = vector.shape_cast %0 : vector<2x1xf32> to vector<2x1xf32>
    %5 = vector.broadcast %4 : vector<2x1xf32> to vector<2x8xf32>
    %c0_4 = arith.constant 0 : index
    %c24 = arith.constant 24 : index
    %6 = vector.load %arg1[%c0_4, %c24] : memref<2x32xf32, #tpu.memory_space<vmem>>, vector<2x8xf32>
    %7 = tpu.concatenate %6, %5 in 1 : vector<2x8xf32>, vector<2x8xf32> -> vector<2x16xf32>
    %8 = tpu.concatenate %1, %2, %3, %7 in 1 : vector<2x16xf32>, vector<2x16xf32>, vector<2x16xf32>, vector<2x16xf32> -> vector<2x64xf32>
    %c0_5 = arith.constant 0 : index
    %c0_6 = arith.constant 0 : index
    %9 = vector.load %arg2[%c0_5, %c0_6] : memref<2x64xf32, #tpu.memory_space<vmem>>, vector<2x64xf32>
    tpu.vector_store %arg2[%c0_5, %c0_6], %8 {strides = array<i32>} : memref<2x64xf32, #tpu.memory_space<vmem>>, vector<2x64xf32>,
    return
  }
  func.func @transform_0(%arg0: i32) -> (i32, i32) {
    %c0_i32 = arith.constant 0 : i32
    %c0_i32_0 = arith.constant 0 : i32
    return %arg0, %c0_i32 : i32, i32
  }
  func.func @transform_1(%arg0: i32) -> (i32, i32) {
    %c0_i32 = arith.constant 0 : i32
    %c0_i32_0 = arith.constant 0 : i32
    return %arg0, %c0_i32 : i32, i32
  }
}

</mosaic_0001>

<llo_original>
// kernel: tpu_custom_call.1
$region0: #{tpu_custom_call.1}
  #allocation0 [shape = 'u32[]', space=smem, size = 0x4, offset = 0x4, fixed_abs, tag = 'smem constant byte address 0x4 - core index']
  #allocation1 [shape = 'u32[144,128]{1,0:T(1,128)}', space=vmem, size = 0x12000, scoped, tag = 'internal scratch']
  %s0 = inlined_call_operand.hbm [shape: f32[2,32], index: 0, kind: input, shape index: {}]
  %s1 = inlined_call_operand.hbm [shape: f32[2,64], index: 1, kind: output, shape index: {}]
  %s2 = sld [smem:[#allocation0]]
  $region18: #{tpu_custom_call.1} parent=0
    _
  %s4 = ssub.s32 1, %s2
  %s5 = scalar_select 0, %s4, %s2
  $region1: #{tpu_custom_call.1} parent=0
    #allocation2 [shape = 'u8[1024]{0}', space=vmem, size = 0x400, scoped, tag = 'input window, operand 0, single buffered']
    #allocation3 [shape = 's32[1]{0}', space=sflag, size = 0x4, scoped, tag = 'scoped memory for tpu_custom_call.1']
    #allocation4 [shape = 's32[1]{0}', space=sflag, size = 0x4, scoped, tag = 'scoped memory for tpu_custom_call.1']
    #allocation5 [shape = 'u8[1024]{0}', space=vmem, size = 0x400, scoped, tag = 'output window, operand 0, single buffered']
    %6 = vsyncpa [#allocation3], 0
    %7 = vsyncpa [#allocation4], 0
    // Predicated region
    $region2: #{tpu_custom_call.1} parent=1 // pred_check
      _
    $region3: #{tpu_custom_call.1} parent=1 // pred_check_branch
      %9 = sbr.rel (0) target = $region5
    $region4: #{tpu_custom_call.1} parent=1 // pred_region
      %s11 = ssub.s32 32, 32
      %12 = vsyncadd [#allocation3], %s11
      %s14 = sshll.u32 [#allocation2], 4
      %s15 = int_to_ptr.vmem [resolvable:$true] %s14
      %17 = dma.hbm_to_vmem [thread:$0]  %s0, 32, %s15, [#allocation3]
    $region5: #{tpu_custom_call.1} parent=1 // pred_fallthru
      _
    // Predicated region
    $region6: #{tpu_custom_call.1} parent=1 // pred_check
      _
    $region7: #{tpu_custom_call.1} parent=1 // pred_check_branch
      %19 = sbr.rel (0) target = $region9
    $region8: #{tpu_custom_call.1} parent=1 // pred_region
      %20 = dma.done [#allocation3], 32
    $region9: #{tpu_custom_call.1} parent=1 // pred_fallthru
      _
    %v21 = vld [vmem:[#allocation2] sm:$0x3]
    %23 = vset.pattern.permute.xlu0 31
    %24 = vperm.xlu0 %23, %v21
    %v25 = vpop.permute.xlu0 %24
    %27 = vrot.lane.b32.xlu0 %v21, 104
    %v28 = vpop.permute.xlu0 %27
    %vm30 = vcmask 64512
    %v31 = vsel %vm30, %v28, %v25
    %32 = vrot.lane.b32.xlu0 %v21, 8
    %v33 = vpop.permute.xlu0 %32
    %35 = vrot.lane.b32.xlu0 %v21, 16
    %v36 = vpop.permute.xlu0 %35
    %39 = vrot.lane.b32.xlu0 %v31, 48
    %v40 = vpop.permute.xlu0 %39
    %vm42 = vcmask 130048
    %v43 = vsel %vm42, %v21, %v33
    %vm44 = vcmask 261120
    %v45 = vsel %vm44, %v43, %v36
    %vm46 = vcmask 392192
    %v47 = vsel %vm46, %v45, %v40
    %vm48 = vcmask 517120
    %49 = vst.msk [vmem:[#allocation5] sm:$0x3] %vm48, %v47
    // Predicated region
    $region10: #{tpu_custom_call.1} parent=1 // pred_check
      _
    $region11: #{tpu_custom_call.1} parent=1 // pred_check_branch
      %51 = sbr.rel (0) target = $region13
    $region12: #{tpu_custom_call.1} parent=1 // pred_region
      %s53 = ssub.s32 32, 32
      %54 = vsyncadd [#allocation4], %s53
      %s56 = sshll.u32 [#allocation5], 4
      %s57 = int_to_ptr.vmem [resolvable:$true] %s56
      %59 = dma.vmem_to_hbm [thread:$0]  %s57, 32, %s1, [#allocation4]
    $region13: #{tpu_custom_call.1} parent=1 // pred_fallthru
      _
    // Predicated region
    $region14: #{tpu_custom_call.1} parent=1 // pred_check
      _
    $region15: #{tpu_custom_call.1} parent=1 // pred_check_branch
      %61 = sbr.rel (0) target = $region17
    $region16: #{tpu_custom_call.1} parent=1 // pred_region
      %62 = dma.done [#allocation4], 32
    $region17: #{tpu_custom_call.1} parent=1 // pred_fallthru
      _
    %63 = vsyncpa [#allocation3], 1
    %64 = vsyncpa [#allocation4], 1

</llo_original>
